<compile_context>
chip_gen: v7x
topology: tpu7x:2x2x1
jax: 0.10.0
libtpu: 0.0.40
codegen_flags: <defaults>
</compile_context>

<pallas_src>
import jax
import jax.numpy as jnp
import numpy as np
from jax.experimental import pallas as pl
from jax.experimental.pallas import tpu as pltpu


def _se_kernel(x_ref, w1_ref, w2_ref, o_ref):
    # x_ref : (R, HW)        VMEM, R = batches_per_block * C (lane-dense, sublane-packed)
    # w1_ref: (bb*Cr, bb*C)  VMEM, block-diagonal first Linear weight (no bias)
    # w2_ref: (bb*C, bb*Cr)  VMEM, block-diagonal second Linear weight (no bias)
    # o_ref : (R, HW)        VMEM
    x = x_ref[...]
    hw = x.shape[1]

    # Global average pool per (batch, channel) row; f32 accumulation without keeping a
    # full f32 copy of the streaming tile live.
    pooled = jnp.sum(x, axis=1, keepdims=True, dtype=jnp.float32) * (1.0 / hw)    # (R, 1)

    # SE MLP on the MXU: one Linear -> ReLU -> Linear -> Sigmoid for the whole block.
    h = jnp.maximum(
        jnp.dot(w1_ref[...], pooled, preferred_element_type=jnp.float32), 0.0)    # (bb*Cr, 1)
    y = jax.nn.sigmoid(
        jnp.dot(w2_ref[...], h, preferred_element_type=jnp.float32))              # (R, 1)

    # Channel scaling in the input dtype: a single dense tile multiply + store.
    o_ref[...] = x * y.astype(x.dtype)


def _block_diag(w, n):
    """Tile weight w (out, in) into an (n*out, n*in) block-diagonal matrix."""
    if n == 1:
        return w
    o, i = w.shape
    eye = jnp.eye(n, dtype=w.dtype)
    return (eye[:, None, :, None] * w[None, :, None, :]).reshape(n * o, n * i)


def _choose_batches_per_block(B, C, HW, itemsize):
    """Pick batches-per-block so that (a) the block's row dim obeys the (8,128)/packing
    sublane rule, (b) double-buffered in+out stays well inside scoped VMEM, and
    (c) >=2 grid steps remain for v7x's two TensorCores when blocks stay large."""
    packing = max(1, 4 // itemsize)            # f32 -> 1, bf16 -> 2, int8 -> 4
    sub = 8 * packing                          # sublane multiple for the block row dim
    bytes_per_batch = C * HW * itemsize
    budget = 6 * 1024 * 1024                   # per-block bytes (2 bufs x (in+out) ~ 24 MiB)

    legal = [bb for bb in range(1, B + 1)
             if B % bb == 0 and (bb == B or (bb * C) % sub == 0)]
    fitting = [bb for bb in legal if bb * bytes_per_batch <= budget]
    bb = max(fitting) if fitting else min(legal)

    # Prefer >=2 parallel grid steps (v7x megacore) when each block would still be
    # >=1 MiB, so per-step overhead stays negligible.
    if bb == B and B > 1:
        smaller = [c for c in legal if c <= B // 2 and c * bytes_per_batch >= (1 << 20)]
        if smaller:
            bb = max(smaller)
    return bb


def se_attention(x, w1, w2):
    """x: (B, C, H, W); w1: (C//r, C); w2: (C, C//r).  Returns (B, C, H, W)."""
    B, C, H, W = x.shape
    HW = H * W
    bb = _choose_batches_per_block(B, C, HW, x.dtype.itemsize)
    R = bb * C
    num_blocks = B // bb

    x2 = x.reshape(B * C, HW)                  # lane-dense, sublane-packed layout
    w1b = _block_diag(w1, bb)                  # (bb*Cr, bb*C)
    w2b = _block_diag(w2, bb)                  # (bb*C, bb*Cr)

    out = pl.pallas_call(
        _se_kernel,
        out_shape=jax.ShapeDtypeStruct((B * C, HW), x.dtype),
        grid_spec=pltpu.PrefetchScalarGridSpec(
            num_scalar_prefetch=0,
            grid=(num_blocks,),
            in_specs=[
                pl.BlockSpec((R, HW), lambda i: (i, 0)),
                pl.BlockSpec(memory_space=pltpu.MemorySpace.VMEM),
                pl.BlockSpec(memory_space=pltpu.MemorySpace.VMEM),
            ],
            out_specs=pl.BlockSpec((R, HW), lambda i: (i, 0)),
        ),
        compiler_params=pltpu.CompilerParams(
            dimension_semantics=("parallel",),
            vmem_limit_bytes=32 * 1024 * 1024),
        # NOTE: pass input_output_aliases={0: 0} here if the caller no longer needs x,
        # to overwrite the activation in place and halve the HBM footprint.
    )(x2, w1b, w2b)

    return out.reshape(B, C, H, W)


def se_ref(x, w1, w2):
    """Pure-JAX reference matching the PyTorch SEAttention forward."""
    y = jnp.mean(x, axis=(2, 3))               # (B, C)  = avg_pool(x).view(b, c)
    h = jnp.maximum(y @ w1.T, 0.0)             # Linear(C -> C//r, no bias) + ReLU
    s = jax.nn.sigmoid(h @ w2.T)               # Linear(C//r -> C, no bias) + Sigmoid
    return x * s[:, :, None, None]             # x * y.expand_as(x)


if __name__ == "__main__":
    B, C, H, W = 2, 4, 16, 16
    reduction = 2
    Cr = C // reduction

    key = jax.random.PRNGKey(0)
    kx, k1, k2 = jax.random.split(key, 3)

    x = jax.random.normal(kx, (B, C, H, W), jnp.float32)
    # Deterministic kaiming-like init for the two bias-free Linear layers.
    w1 = jax.random.normal(k1, (Cr, C), jnp.float32) * np.sqrt(2.0 / C)
    w2 = jax.random.normal(k2, (C, Cr), jnp.float32) * np.sqrt(2.0 / Cr)

    # f32 path
    out = jax.block_until_ready(se_attention(x, w1, w2))
    ref = se_ref(x, w1, w2)
    np.testing.assert_allclose(np.asarray(out), np.asarray(ref), rtol=1e-5, atol=1e-5)

    # bf16 activation path (weights stay f32), validated with bf16-appropriate tolerance.
    xb = x.astype(jnp.bfloat16)
    out_b = jax.block_until_ready(se_attention(xb, w1, w2))
    ref_b = se_ref(xb.astype(jnp.float32), w1, w2)
    np.testing.assert_allclose(np.asarray(out_b.astype(jnp.float32)),
                               np.asarray(ref_b), rtol=3e-2, atol=3e-2)

    print("KERNEL_OK")
</pallas_src>

<mosaic_0001>
module attributes {stable_mosaic.version = 11 : i64} {
  func.func @_se_kernel(%arg0: i32, %arg1: memref<8x256xf32, #tpu.memory_space<vmem>>, %arg2: memref<4x8xf32, #tpu.memory_space<vmem>>, %arg3: memref<8x4xf32, #tpu.memory_space<vmem>>, %arg4: memref<8x256xf32, #tpu.memory_space<vmem>>) attributes {dimension_semantics = [#tpu.dimension_semantics<parallel>], iteration_bounds = array<i64: 1>, scalar_prefetch = 0 : i64, scratch_operands = 0 : i64, tpu.core_type = #tpu.core_type<tc>, window_params = [{transform_indices = @transform_0, window_bounds = array<i64: 8, 256>}, {pipeline_mode = #tpu.pipeline_mode<synchronous>, transform_indices = @transform_1, window_bounds = array<i64: 4, 8>}, {pipeline_mode = #tpu.pipeline_mode<synchronous>, transform_indices = @transform_2, window_bounds = array<i64: 8, 4>}, {transform_indices = @transform_3, window_bounds = array<i64: 8, 256>}]} {
    %c0 = arith.constant 0 : index
    %c0_0 = arith.constant 0 : index
    %0 = vector.load %arg1[%c0, %c0_0] : memref<8x256xf32, #tpu.memory_space<vmem>>, vector<8x256xf32>
    %cst = arith.constant dense<0.000000e+00> : vector<8xf32>
    %1 = vector.multi_reduction <add>, %0, %cst [1] : vector<8x256xf32> to vector<8xf32>
    %2 = vector.shape_cast %1 : vector<8xf32> to vector<8x1xf32>
    %cst_1 = arith.constant 3.906250e-03 : f32
    %3 = vector.broadcast %cst_1 : f32 to vector<8x1xf32>
    %4 = arith.mulf %2, %3 : vector<8x1xf32>
    %c0_2 = arith.constant 0 : index
    %c0_3 = arith.constant 0 : index
    %5 = vector.load %arg2[%c0_2, %c0_3] : memref<4x8xf32, #tpu.memory_space<vmem>>, vector<4x8xf32>
    %cst_4 = arith.constant dense<0.000000e+00> : vector<4x1xf32>
    %6 = tpu.matmul %5, %4, %cst_4 {dimension_numbers = #tpu.dot_dimension_numbers<[1], [0], [0], [1], [0, 0, 1, 1], [], []>} : vector<4x8xf32>, vector<8x1xf32>, vector<4x1xf32> -> vector<4x1xf32>
    %cst_5 = arith.constant 0.000000e+00 : f32
    %7 = vector.broadcast %cst_5 : f32 to vector<4x1xf32>
    %8 = arith.maximumf %6, %7 : vector<4x1xf32>
    %c0_6 = arith.constant 0 : index
    %c0_7 = arith.constant 0 : index
    %9 = vector.load %arg3[%c0_6, %c0_7] : memref<8x4xf32, #tpu.memory_space<vmem>>, vector<8x4xf32>
    %cst_8 = arith.constant dense<0.000000e+00> : vector<8x1xf32>
    %10 = tpu.matmul %9, %8, %cst_8 {dimension_numbers = #tpu.dot_dimension_numbers<[1], [0], [0], [1], [0, 0, 1, 1], [], []>} : vector<8x4xf32>, vector<4x1xf32>, vector<8x1xf32> -> vector<8x1xf32>
    %11 = arith.negf %10 : vector<8x1xf32>
    %12 = math.exp %11 : vector<8x1xf32>
    %cst_9 = arith.constant 1.000000e+00 : f32
    %13 = vector.broadcast %cst_9 : f32 to vector<8x1xf32>
    %14 = arith.addf %13, %12 : vector<8x1xf32>
    %15 = arith.divf %13, %14 : vector<8x1xf32>
    %16 = vector.broadcast %15 : vector<8x1xf32> to vector<8x256xf32>
    %17 = arith.mulf %0, %16 : vector<8x256xf32>
    %c0_10 = arith.constant 0 : index
    %c0_11 = arith.constant 0 : index
    %18 = vector.load %arg4[%c0_10, %c0_11] : memref<8x256xf32, #tpu.memory_space<vmem>>, vector<8x256xf32>
    tpu.vector_store %arg4[%c0_10, %c0_11], %17 {strides = array<i32>} : memref<8x256xf32, #tpu.memory_space<vmem>>, vector<8x256xf32>,
    return
  }
  func.func @transform_0(%arg0: i32) -> (i32, i32) {
    %c0_i32 = arith.constant 0 : i32
    %c0_i32_0 = arith.constant 0 : i32
    return %arg0, %c0_i32 : i32, i32
  }
  func.func @transform_1(%arg0: i32) -> (i32, i32) {
    %c0_i32 = arith.constant 0 : i32
    %c0_i32_0 = arith.constant 0 : i32
    %c0_i32_1 = arith.constant 0 : i32
    return %c0_i32, %c0_i32_0 : i32, i32
  }
  func.func @transform_2(%arg0: i32) -> (i32, i32) {
    %c0_i32 = arith.constant 0 : i32
    %c0_i32_0 = arith.constant 0 : i32
    %c0_i32_1 = arith.constant 0 : i32
    return %c0_i32, %c0_i32_0 : i32, i32
  }
  func.func @transform_3(%arg0: i32) -> (i32, i32) {
    %c0_i32 = arith.constant 0 : i32
    %c0_i32_0 = arith.constant 0 : i32
    return %arg0, %c0_i32 : i32, i32
  }
}

</mosaic_0001>

<llo_original>
// kernel: tpu_custom_call.1
$region0: #{tpu_custom_call.1}
  #allocation0 [shape = 'u32[]', space=smem, size = 0x4, offset = 0x4, fixed_abs, tag = 'smem constant byte address 0x4 - core index']
  #allocation1 [shape = 'u32[144,128]{1,0:T(1,128)}', space=vmem, size = 0x12000, scoped, tag = 'internal scratch']
  %s0 = inlined_call_operand.hbm [shape: f32[8,256], index: 0, kind: input, shape index: {}]
  %s1 = inlined_call_operand.vmem [shape: f32[4,8], index: 1, kind: input, shape index: {}]
  %s2 = inlined_call_operand.vmem [shape: f32[8,4], index: 2, kind: input, shape index: {}]
  %s3 = inlined_call_operand.hbm [shape: f32[8,256], index: 3, kind: output, shape index: {}]
  %s4 = sld [smem:[#allocation0]]
  $region26: #{tpu_custom_call.1} parent=0
    _
  %s6 = ssub.s32 1, %s4
  %s7 = scalar_select 0, %s6, %s4
  $region1: #{tpu_custom_call.1} parent=0
    #allocation2 [shape = 'u8[8192]{0}', space=vmem, size = 0x2000, scoped, tag = 'input window, operand 0, single buffered']
    #allocation3 [shape = 's32[1]{0}', space=sflag, size = 0x4, scoped, tag = 'scoped memory for tpu_custom_call.1']
    #allocation4 [shape = 's32[1]{0}', space=sflag, size = 0x4, scoped, tag = 'scoped memory for tpu_custom_call.1']
    #allocation5 [shape = 'u8[8192]{0}', space=vmem, size = 0x2000, scoped, tag = 'output window, operand 0, single buffered']
    %8 = vsyncpa [#allocation3], 0
    %9 = vsyncpa [#allocation4], 0
    // Predicated region
    $region2: #{tpu_custom_call.1} parent=1 // pred_check
      _
    $region3: #{tpu_custom_call.1} parent=1 // pred_check_branch
      %11 = sbr.rel (0) target = $region5
    $region4: #{tpu_custom_call.1} parent=1 // pred_region
      %s13 = ssub.s32 256, 256
      %14 = vsyncadd [#allocation3], %s13
      %s16 = sshll.u32 [#allocation2], 4
      %s17 = int_to_ptr.vmem [resolvable:$true] %s16
      %19 = dma.hbm_to_vmem [thread:$0]  %s0, 256, %s17, [#allocation3]
    $region5: #{tpu_custom_call.1} parent=1 // pred_fallthru
      _
    // Predicated region
    $region6: #{tpu_custom_call.1} parent=1 // pred_check
      _
    $region7: #{tpu_custom_call.1} parent=1 // pred_check_branch
      %21 = sbr.rel (0) target = $region9
    $region8: #{tpu_custom_call.1} parent=1 // pred_region
      _
    $region9: #{tpu_custom_call.1} parent=1 // pred_fallthru
      _
    // Predicated region
    $region10: #{tpu_custom_call.1} parent=1 // pred_check
      _
    $region11: #{tpu_custom_call.1} parent=1 // pred_check_branch
      %23 = sbr.rel (0) target = $region13
    $region12: #{tpu_custom_call.1} parent=1 // pred_region
      _
    $region13: #{tpu_custom_call.1} parent=1 // pred_fallthru
      _
    // Predicated region
    $region14: #{tpu_custom_call.1} parent=1 // pred_check
      _
    $region15: #{tpu_custom_call.1} parent=1 // pred_check_branch
      %25 = sbr.rel (0) target = $region17
    $region16: #{tpu_custom_call.1} parent=1 // pred_region
      %26 = dma.done [#allocation3], 256
    $region17: #{tpu_custom_call.1} parent=1 // pred_fallthru
      _
    %v27 = vld [vmem:[#allocation2] sm:$0xff]
    %v28 = vld [vmem:[#allocation2 + $0x8] sm:$0xff]
    %v29 = vadd.f32 %v27, %v28
    %30 = vadd.xlane.f32.xlu0 %v29
    %v31 = vpop.xlane.xlu0 %30
    %v32 = vmul.f32 %v31, 0.00390625
    %v33 = vld [vmem:[%s1] sm:$0xf]
    %vm34 = vcmask 64512
    %v36 = vsel %vm34, %v33, 0
    %38 = vmatprep.subr.mxu0 0.0
    %39 = vmatpush1.msra.mxu0 %v32
    %40 = vmatprep.subr.mxu0 0.0
    %41 = vmatpush1.msra.mxu0 0.0
    %42 = vmatprep.subr.mxu0 0.0
    %43 = vmatpush1.msra.mxu0 0.0
    %44 = vmatprep.subr.mxu0 0.0
    %45 = vmatpush1.msra.mxu0 0.0
    %46 = vmatprep.subr.mxu0 0.0
    %47 = vmatpush1.msra.mxu0 0.0
    %48 = vmatprep.subr.mxu0 0.0
    %49 = vmatpush1.msra.mxu0 0.0
    %50 = vmatprep.subr.mxu0 0.0
    %51 = vmatpush1.msra.mxu0 0.0
    %52 = vmatprep.subr.mxu0 0.0
    %53 = vmatpush1.msra.mxu0 0.0
    %54 = vmatprep.subr.mxu0 0.0
    %55 = vmatpush1.msra.mxu0 0.0
    %56 = vmatprep.subr.mxu0 0.0
    %57 = vmatpush1.msra.mxu0 0.0
    %58 = vmatprep.subr.mxu0 0.0
    %59 = vmatpush1.msra.mxu0 0.0
    %60 = vmatprep.subr.mxu0 0.0
    %61 = vmatpush1.msra.mxu0 0.0
    %62 = vmatprep.subr.mxu0 0.0
    %63 = vmatpush1.msra.mxu0 0.0
    %64 = vmatprep.subr.mxu0 0.0
    %65 = vmatpush1.msra.mxu0 0.0
    %66 = vmatprep.subr.mxu0 0.0
    %67 = vmatpush1.msra.mxu0 0.0
    %68 = vmatprep.subr.mxu0 0.0
    %69 = vmatpush1.msra.mxu0 0.0
    %70 = vmatprep.subr.mxu0 0.0
    %71 = vmatpush1.msra.mxu0 0.0
    %72 = vmatprep.subr.mxu0 0.0
    %73 = vmatpush1.msra.mxu0 0.0
    %74 = vmatprep.subr.mxu0 0.0
    %75 = vmatpush1.msra.mxu0 0.0
    %76 = vmatprep.subr.mxu0 0.0
    %77 = vmatpush1.msra.mxu0 0.0
    %78 = vmatprep.subr.mxu0 0.0
    %79 = vmatpush1.msra.mxu0 0.0
    %80 = vmatprep.subr.mxu0 0.0
    %81 = vmatpush1.msra.mxu0 0.0
    %82 = vmatprep.subr.mxu0 0.0
    %83 = vmatpush1.msra.mxu0 0.0
    %84 = vmatprep.subr.mxu0 0.0
    %85 = vmatpush1.msra.mxu0 0.0
    %86 = vmatprep.subr.mxu0 0.0
    %87 = vmatpush1.msra.mxu0 0.0
    %88 = vmatprep.subr.mxu0 0.0
    %89 = vmatpush1.msra.mxu0 0.0
    %90 = vmatprep.subr.mxu0 0.0
    %91 = vmatpush1.msra.mxu0 0.0
    %92 = vmatprep.subr.mxu0 0.0
    %93 = vmatpush1.msra.mxu0 0.0
    %94 = vmatprep.subr.mxu0 0.0
    %95 = vmatpush1.msra.mxu0 0.0
    %96 = vmatprep.subr.mxu0 0.0
    %97 = vmatpush1.msra.mxu0 0.0
    %98 = vmatprep.subr.mxu0 0.0
    %99 = vmatpush1.msra.mxu0 0.0
    %100 = vmatprep.subr.mxu0 0.0
    %101 = vmatpush1.msra.mxu0 0.0
    %102 = vmatprep.mubr.f32.mxu0 0.0
    %103 = vmatmul.mubr.f32.gmra.mrb[0].mxu0 %v36
    %v104 = vpop.f32.mrb[0].mxu0
    %v105 = vadd.f32 0.0, %v104
    %v106 = vpop.f32.mrb[0].mxu0
    %107 = vdwg.mxu0
    %v108 = vmax.f32 %v105, 0.0
    %v109 = vld [vmem:[%s2] sm:$0xff]
    %vm110 = vcmask 31744
    %v112 = vsel %vm110, %v109, 0
    %vm114 = vcmask 1043456
    %v116 = vsel %vm114, %v108, 0
    %118 = vmatprep.subr.mxu0 0.0
    %119 = vmatpush1.msra.mxu0 %v116
    %120 = vmatprep.subr.mxu0 0.0
    %121 = vmatpush1.msra.mxu0 0.0
    %122 = vmatprep.subr.mxu0 0.0
    %123 = vmatpush1.msra.mxu0 0.0
    %124 = vmatprep.subr.mxu0 0.0
    %125 = vmatpush1.msra.mxu0 0.0
    %126 = vmatprep.subr.mxu0 0.0
    %127 = vmatpush1.msra.mxu0 0.0
    %128 = vmatprep.subr.mxu0 0.0
    %129 = vmatpush1.msra.mxu0 0.0
    %130 = vmatprep.subr.mxu0 0.0
    %131 = vmatpush1.msra.mxu0 0.0
    %132 = vmatprep.subr.mxu0 0.0
    %133 = vmatpush1.msra.mxu0 0.0
    %134 = vmatprep.subr.mxu0 0.0
    %135 = vmatpush1.msra.mxu0 0.0
    %136 = vmatprep.subr.mxu0 0.0
    %137 = vmatpush1.msra.mxu0 0.0
    %138 = vmatprep.subr.mxu0 0.0
    %139 = vmatpush1.msra.mxu0 0.0
    %140 = vmatprep.subr.mxu0 0.0
    %141 = vmatpush1.msra.mxu0 0.0
    %142 = vmatprep.subr.mxu0 0.0
    %143 = vmatpush1.msra.mxu0 0.0
    %144 = vmatprep.subr.mxu0 0.0
    %145 = vmatpush1.msra.mxu0 0.0
    %146 = vmatprep.subr.mxu0 0.0
    %147 = vmatpush1.msra.mxu0 0.0
    %148 = vmatprep.subr.mxu0 0.0
    %149 = vmatpush1.msra.mxu0 0.0
    %150 = vmatprep.subr.mxu0 0.0
    %151 = vmatpush1.msra.mxu0 0.0
    %152 = vmatprep.subr.mxu0 0.0
    %153 = vmatpush1.msra.mxu0 0.0
    %154 = vmatprep.subr.mxu0 0.0
    %155 = vmatpush1.msra.mxu0 0.0
    %156 = vmatprep.subr.mxu0 0.0
    %157 = vmatpush1.msra.mxu0 0.0
    %158 = vmatprep.subr.mxu0 0.0
    %159 = vmatpush1.msra.mxu0 0.0
    %160 = vmatprep.subr.mxu0 0.0
    %161 = vmatpush1.msra.mxu0 0.0
    %162 = vmatprep.subr.mxu0 0.0
    %163 = vmatpush1.msra.mxu0 0.0
    %164 = vmatprep.subr.mxu0 0.0
    %165 = vmatpush1.msra.mxu0 0.0
    %166 = vmatprep.subr.mxu0 0.0
    %167 = vmatpush1.msra.mxu0 0.0
    %168 = vmatprep.subr.mxu0 0.0
    %169 = vmatpush1.msra.mxu0 0.0
    %170 = vmatprep.subr.mxu0 0.0
    %171 = vmatpush1.msra.mxu0 0.0
    %172 = vmatprep.subr.mxu0 0.0
    %173 = vmatpush1.msra.mxu0 0.0
    %174 = vmatprep.subr.mxu0 0.0
    %175 = vmatpush1.msra.mxu0 0.0
    %176 = vmatprep.subr.mxu0 0.0
    %177 = vmatpush1.msra.mxu0 0.0
    %178 = vmatprep.subr.mxu0 0.0
    %179 = vmatpush1.msra.mxu0 0.0
    %180 = vmatprep.subr.mxu0 0.0
    %181 = vmatpush1.msra.mxu0 0.0
    %182 = vmatprep.mubr.f32.mxu0 0.0
    %183 = vmatmul.mubr.f32.gmra.mrb[0].mxu0 %v112
    %v184 = vpop.f32.mrb[0].mxu0
    %v185 = vadd.f32 0.0, %v184
    %v186 = vpop.f32.mrb[0].mxu0
    %187 = vdwg.mxu0
    %v188 = vxor.u32 %v185, 2147483648
    %v189 = vmul.f32 %v188, 1.442695
    %v190 = vpow.pop %v189
    %v191 = vadd.f32 %v190, 1.0
    %v192 = vrcp.pop %v191
    %v193 = vmul.f32 1.0, %v192
    %195 = vset.pattern.permute.xlu0 0
    %196 = vperm.xlu0 %195, %v193
    %v197 = vpop.permute.xlu0 %196
    %v199 = vmul.f32 %v27, %v197
    %v200 = vmul.f32 %v28, %v197
    %201 = vst [vmem:[#allocation5] sm:$0xff] %v199
    %202 = vst [vmem:[#allocation5 + $0x8] sm:$0xff] %v200
    // Predicated region
    $region18: #{tpu_custom_call.1} parent=1 // pred_check
      _
    $region19: #{tpu_custom_call.1} parent=1 // pred_check_branch
      %204 = sbr.rel (0) target = $region21
    $region20: #{tpu_custom_call.1} parent=1 // pred_region
      %s206 = ssub.s32 256, 256
      %207 = vsyncadd [#allocation4], %s206
      %s209 = sshll.u32 [#allocation5], 4
      %s210 = int_to_ptr.vmem [resolvable:$true] %s209
      %212 = dma.vmem_to_hbm [thread:$0]  %s210, 256, %s3, [#allocation4]
    $region21: #{tpu_custom_call.1} parent=1 // pred_fallthru
      _
    // Predicated region
    $region22: #{tpu_custom_call.1} parent=1 // pred_check
      _
    $region23: #{tpu_custom_call.1} parent=1 // pred_check_branch
      %214 = sbr.rel (0) target = $region25
    $region24: #{tpu_custom_call.1} parent=1 // pred_region
      %215 = dma.done [#allocation4], 256
    $region25: #{tpu_custom_call.1} parent=1 // pred_fallthru
      _
    %216 = vsyncpa [#allocation3], 1
    %217 = vsyncpa [#allocation4], 1

</llo_original>
